<compile_context>
chip_gen: v7x
topology: tpu7x:2x2x1
jax: 0.10.0
libtpu: 0.0.40
codegen_flags: <defaults>
</compile_context>

<pallas_src>
import functools

import jax
import jax.numpy as jnp
from jax.experimental import pallas as pl
from jax.experimental.pallas import tpu as pltpu


def _round_up(n, m):
    return ((n + m - 1) // m) * m


def relu_kan_kernel(x_ref, gamma_ref, beta_ref, plow_ref, phigh_ref,
                    w_ref, b_ref, o_ref, *, num_basis, eps):
    # --- LayerNorm over the feature dim (torch nn.LayerNorm(input_size)) ---
    # Single-pass stats: one XLU reduction pair instead of two mean passes.
    x = x_ref[...]                                          # (TB, I) f32
    inv_i = 1.0 / x.shape[-1]
    mean = jnp.sum(x, axis=-1, keepdims=True) * inv_i
    ex2 = jnp.sum(x * x, axis=-1, keepdims=True) * inv_i
    var = ex2 - mean * mean
    xn = (x - mean) * jax.lax.rsqrt(var + eps)
    xn = xn * gamma_ref[...] + beta_ref[...]                # (TB, I) f32

    # --- Lane-dense ReLU-KAN basis block -----------------------------------
    # Replicate xn G times along lanes: column c = j*I + i (basis-major),
    # matching the flattened phase vectors and the fused weight matrix rows.
    # (G*I = 128 here, so every vreg is fully lane-dense.)
    xt = jnp.concatenate([xn] * num_basis, axis=-1)         # (TB, G*I) f32
    x1 = jnp.maximum(xt - plow_ref[...], 0.0)
    x2 = jnp.maximum(phigh_ref[...] - xt, 0.0)
    f = x1 * x2
    f = f * f                                               # (TB, G*I) f32

    # --- One fused MXU matmul (r^2 already folded into w) ------------------
    out = jnp.dot(f.astype(w_ref.dtype), w_ref[...],
                  preferred_element_type=jnp.float32)       # (TB, O) f32
    o_ref[...] = (out + b_ref[...]).astype(o_ref.dtype)


def prepare_relu_kan_params(conv_w, conv_b, gamma, beta, phase_low, phase_high,
                            g, k, mxu_dtype=jnp.bfloat16):
    """One-time parameter folding (not per-call work).

    conv_w: (O, 1, G, I) Conv2d weight; conv_b: (O,); gamma/beta: (I,);
    phase_low/phase_high: (I, G) as in the torch module.
    """
    O = conv_w.shape[0]
    G = conv_w.shape[2]
    I = conv_w.shape[3]
    assert G == g + k
    K = G * I
    r = 4.0 * g * g / ((k + 1) * (k + 1))

    # torch reshapes the contiguous (B, I, G) basis buffer to (B, 1, G, I), so
    # the conv weight at flat window index f = h*I + w multiplies the basis
    # value at flat index f = i*G + j, i.e. conv_w.reshape(O, I, G)[o, i, j]
    # multiplies basis (input i, basis j).  The kernel builds the basis block
    # with column c = j*I + i (basis-major concat), so fused weight row
    # c = j*I + i must hold conv_w.reshape(O, I, G)[o, i, j].
    w = conv_w.reshape(O, I, G).transpose(2, 1, 0)          # (G, I, O)
    w = (w * (r * r)).reshape(K, O)                         # fold r^2, fuse K
    bias = conv_b.reshape(1, O)

    return dict(
        gamma=gamma.reshape(1, I).astype(jnp.float32),
        beta=beta.reshape(1, I).astype(jnp.float32),
        phase_low=phase_low.T.reshape(1, K).astype(jnp.float32),   # c = j*I+i
        phase_high=phase_high.T.reshape(1, K).astype(jnp.float32),
        w=w.astype(mxu_dtype),
        bias=bias.astype(jnp.float32),
        in_features=I,
        out_features=O,
        num_basis=G,
    )


def relu_kan_layer(x, params, *, block_b=1024, out_dtype=None, eps=1e-5,
                   interpret=False):
    """x: (B, I) f32 -> (B, O) in out_dtype (default x.dtype)."""
    B, I = x.shape
    assert I == params["in_features"]
    G = params["num_basis"]
    K = G * I
    O = params["out_features"]
    out_dtype = x.dtype if out_dtype is None else out_dtype

    assert block_b % 8 == 0
    TB = min(block_b, _round_up(B, 8))            # batch tile (sublane-aligned)
    # Force >=2 grid steps so the "parallel" batch axis can shard across both
    # TensorCores on v7x (harmless on single-TC v5e/v6e).
    if B > 8 and _round_up(B, TB) // TB < 2:
        TB = max(8, _round_up((TB + 1) // 2, 8))
    Bp = _round_up(B, TB)
    if Bp != B:
        x = jnp.pad(x, ((0, Bp - B), (0, 0)))     # pad rows sliced off below

    # VMEM limit sized to the real footprint: resident params + double-buffered
    # x / out tiles + in-kernel temporaries, with generous headroom.
    w_item = jnp.dtype(params["w"].dtype).itemsize
    resident = K * O * w_item + 2 * K * 4 + 2 * I * 4 + O * 4
    per_step = 2 * TB * I * 4 + 2 * TB * O * jnp.dtype(out_dtype).itemsize
    temps = 6 * TB * K                            # basis block f32 + cast copy
    vmem_bytes = int(min(64 << 20, max(16 << 20,
                                       2 * (resident + per_step + temps))))

    kernel = functools.partial(relu_kan_kernel, num_basis=G, eps=eps)
    out = pl.pallas_call(
        kernel,
        out_shape=jax.ShapeDtypeStruct((Bp, O), out_dtype),
        grid=(Bp // TB,),
        in_specs=[
            pl.BlockSpec((TB, I), lambda b: (b, 0)),     # x (streamed)
            pl.BlockSpec((1, I), lambda b: (0, 0)),      # gamma (resident)
            pl.BlockSpec((1, I), lambda b: (0, 0)),      # beta
            pl.BlockSpec((1, K), lambda b: (0, 0)),      # phase_low (flat)
            pl.BlockSpec((1, K), lambda b: (0, 0)),      # phase_high (flat)
            pl.BlockSpec((K, O), lambda b: (0, 0)),      # fused conv weights
            pl.BlockSpec((1, O), lambda b: (0, 0)),      # bias
        ],
        out_specs=pl.BlockSpec((TB, O), lambda b: (b, 0)),
        compiler_params=pltpu.CompilerParams(
            dimension_semantics=("parallel",),
            vmem_limit_bytes=vmem_bytes,
        ),
        interpret=interpret,
    )(x, params["gamma"], params["beta"], params["phase_low"],
      params["phase_high"], params["w"], params["bias"])
    return out[:B]


if __name__ == "__main__":
    # Small shapes consistent with the module: x is (batch, input_size).
    B, I, g, k, O = 48, 16, 5, 3, 32
    G = g + k                                   # 8 basis fns -> G*I = 128 = K

    key = jax.random.PRNGKey(0)
    kx, kw, kb = jax.random.split(key, 3)
    x = jax.random.normal(kx, (B, I), jnp.float32)

    # Module parameters (torch shapes / default-style init, built in-script).
    phase_low_1d = jnp.arange(-k, g, dtype=jnp.float32) / g
    phase_high_1d = phase_low_1d + (k + 1) / g
    phase_low = jnp.broadcast_to(phase_low_1d[None, :], (I, G))     # (I, G)
    phase_high = jnp.broadcast_to(phase_high_1d[None, :], (I, G))
    gamma = jnp.ones((I,), jnp.float32)
    beta = jnp.zeros((I,), jnp.float32)
    fan_in = G * I
    conv_w = jax.random.normal(kw, (O, 1, G, I), jnp.float32) / jnp.sqrt(fan_in)
    conv_b = 0.01 * jax.random.normal(kb, (O,), jnp.float32)

    # Pure-JAX reference mirroring the torch forward exactly (f32).
    mean = jnp.mean(x, axis=-1, keepdims=True)
    var = jnp.mean((x - mean) ** 2, axis=-1, keepdims=True)
    xn = (x - mean) / jnp.sqrt(var + 1e-5) * gamma + beta
    r = 4.0 * g * g / ((k + 1) * (k + 1))
    xe = xn[:, :, None]                                             # (B, I, 1)
    x1 = jax.nn.relu(xe - phase_low[None])
    x2 = jax.nn.relu(phase_high[None] - xe)
    feat = (x1 * x2 * r) ** 2                                       # (B, I, G)
    feat = feat.reshape(B, 1, G, I)                                 # torch reshape
    ref = jnp.einsum("bchw,ochw->bo", feat, conv_w) + conv_b

    # 1) f32 MXU weights, production-default tiling (block_b=1024 collapses to
    #    two 24-row steps here, exercising the >=2-step v7x split): exact check.
    params_f32 = prepare_relu_kan_params(conv_w, conv_b, gamma, beta,
                                         phase_low, phase_high, g, k,
                                         mxu_dtype=jnp.float32)
    out_f32 = jax.block_until_ready(relu_kan_layer(x, params_f32))
    assert out_f32.shape == (B, O)
    assert jnp.allclose(out_f32, ref, atol=1e-4, rtol=1e-4), "f32 mismatch vs reference"

    # 2) bf16 MXU weights (recommended config), f32 accumulation/output;
    #    block_b=32 exercises an explicit multi-step grid + batch padding.
    params_bf16 = prepare_relu_kan_params(conv_w, conv_b, gamma, beta,
                                          phase_low, phase_high, g, k,
                                          mxu_dtype=jnp.bfloat16)
    out_bf16 = jax.block_until_ready(relu_kan_layer(x, params_bf16, block_b=32))
    assert out_bf16.shape == (B, O)
    assert jnp.allclose(out_bf16, ref, atol=2e-2, rtol=2e-2), "bf16 mismatch vs reference"

    # 3) bf16 weights + bf16 output writeback (halves output HBM traffic).
    out_b16o = jax.block_until_ready(
        relu_kan_layer(x, params_bf16, block_b=32, out_dtype=jnp.bfloat16))
    assert out_b16o.shape == (B, O) and out_b16o.dtype == jnp.bfloat16
    assert jnp.allclose(out_b16o.astype(jnp.float32), ref, atol=5e-2, rtol=5e-2), \
        "bf16-output mismatch vs reference"

    print("KERNEL_OK")
</pallas_src>

<mosaic_0001>
module attributes {stable_mosaic.version = 11 : i64} {
  func.func @relu_kan_kernel(%arg0: i32, %arg1: memref<24x16xf32, #tpu.memory_space<vmem>>, %arg2: memref<1x16xf32, #tpu.memory_space<vmem>>, %arg3: memref<1x16xf32, #tpu.memory_space<vmem>>, %arg4: memref<1x128xf32, #tpu.memory_space<vmem>>, %arg5: memref<1x128xf32, #tpu.memory_space<vmem>>, %arg6: memref<128x32xf32, #tpu.memory_space<vmem>>, %arg7: memref<1x32xf32, #tpu.memory_space<vmem>>, %arg8: memref<24x32xf32, #tpu.memory_space<vmem>>) attributes {dimension_semantics = [#tpu.dimension_semantics<parallel>], iteration_bounds = array<i64: 2>, scalar_prefetch = 0 : i64, scratch_operands = 0 : i64, tpu.core_type = #tpu.core_type<tc>, window_params = [{transform_indices = @transform_0, window_bounds = array<i64: 24, 16>}, {pipeline_mode = #tpu.pipeline_mode<synchronous>, transform_indices = @transform_1, window_bounds = array<i64: 1, 16>}, {pipeline_mode = #tpu.pipeline_mode<synchronous>, transform_indices = @transform_2, window_bounds = array<i64: 1, 16>}, {pipeline_mode = #tpu.pipeline_mode<synchronous>, transform_indices = @transform_3, window_bounds = array<i64: 1, 128>}, {pipeline_mode = #tpu.pipeline_mode<synchronous>, transform_indices = @transform_4, window_bounds = array<i64: 1, 128>}, {pipeline_mode = #tpu.pipeline_mode<synchronous>, transform_indices = @transform_5, window_bounds = array<i64: 128, 32>}, {pipeline_mode = #tpu.pipeline_mode<synchronous>, transform_indices = @transform_6, window_bounds = array<i64: 1, 32>}, {transform_indices = @transform_7, window_bounds = array<i64: 24, 32>}]} {
    %c0 = arith.constant 0 : index
    %c0_0 = arith.constant 0 : index
    %0 = vector.load %arg1[%c0, %c0_0] : memref<24x16xf32, #tpu.memory_space<vmem>>, vector<24x16xf32>
    %cst = arith.constant dense<0.000000e+00> : vector<24xf32>
    %1 = vector.multi_reduction <add>, %0, %cst [1] : vector<24x16xf32> to vector<24xf32>
    %2 = vector.shape_cast %1 : vector<24xf32> to vector<24x1xf32>
    %cst_1 = arith.constant 6.250000e-02 : f32
    %3 = vector.broadcast %cst_1 : f32 to vector<24x1xf32>
    %4 = arith.mulf %2, %3 : vector<24x1xf32>
    %5 = arith.mulf %0, %0 : vector<24x16xf32>
    %cst_2 = arith.constant dense<0.000000e+00> : vector<24xf32>
    %6 = vector.multi_reduction <add>, %5, %cst_2 [1] : vector<24x16xf32> to vector<24xf32>
    %7 = vector.shape_cast %6 : vector<24xf32> to vector<24x1xf32>
    %cst_3 = arith.constant 6.250000e-02 : f32
    %8 = vector.broadcast %cst_3 : f32 to vector<24x1xf32>
    %9 = arith.mulf %7, %8 : vector<24x1xf32>
    %10 = arith.mulf %4, %4 : vector<24x1xf32>
    %11 = arith.subf %9, %10 : vector<24x1xf32>
    %12 = vector.broadcast %4 : vector<24x1xf32> to vector<24x16xf32>
    %13 = arith.subf %0, %12 : vector<24x16xf32>
    %cst_4 = arith.constant 9.99999974E-6 : f32
    %14 = vector.broadcast %cst_4 : f32 to vector<24x1xf32>
    %15 = arith.addf %11, %14 : vector<24x1xf32>
    %16 = math.rsqrt %15 : vector<24x1xf32>
    %17 = vector.broadcast %16 : vector<24x1xf32> to vector<24x16xf32>
    %18 = arith.mulf %13, %17 : vector<24x16xf32>
    %c0_5 = arith.constant 0 : index
    %c0_6 = arith.constant 0 : index
    %19 = vector.load %arg2[%c0_5, %c0_6] : memref<1x16xf32, #tpu.memory_space<vmem>>, vector<1x16xf32>
    %20 = vector.broadcast %19 : vector<1x16xf32> to vector<24x16xf32>
    %21 = arith.mulf %18, %20 : vector<24x16xf32>
    %c0_7 = arith.constant 0 : index
    %c0_8 = arith.constant 0 : index
    %22 = vector.load %arg3[%c0_7, %c0_8] : memref<1x16xf32, #tpu.memory_space<vmem>>, vector<1x16xf32>
    %23 = vector.broadcast %22 : vector<1x16xf32> to vector<24x16xf32>
    %24 = arith.addf %21, %23 : vector<24x16xf32>
    %25 = tpu.concatenate %24, %24, %24, %24, %24, %24, %24, %24 in 1 : vector<24x16xf32>, vector<24x16xf32>, vector<24x16xf32>, vector<24x16xf32>, vector<24x16xf32>, vector<24x16xf32>, vector<24x16xf32>, vector<24x16xf32> -> vector<24x128xf32>
    %c0_9 = arith.constant 0 : index
    %c0_10 = arith.constant 0 : index
    %26 = vector.load %arg4[%c0_9, %c0_10] : memref<1x128xf32, #tpu.memory_space<vmem>>, vector<1x128xf32>
    %27 = vector.broadcast %26 : vector<1x128xf32> to vector<24x128xf32>
    %28 = arith.subf %25, %27 : vector<24x128xf32>
    %cst_11 = arith.constant 0.000000e+00 : f32
    %29 = vector.broadcast %cst_11 : f32 to vector<24x128xf32>
    %30 = arith.maximumf %28, %29 : vector<24x128xf32>
    %c0_12 = arith.constant 0 : index
    %c0_13 = arith.constant 0 : index
    %31 = vector.load %arg5[%c0_12, %c0_13] : memref<1x128xf32, #tpu.memory_space<vmem>>, vector<1x128xf32>
    %32 = vector.broadcast %31 : vector<1x128xf32> to vector<24x128xf32>
    %33 = arith.subf %32, %25 : vector<24x128xf32>
    %cst_14 = arith.constant 0.000000e+00 : f32
    %34 = vector.broadcast %cst_14 : f32 to vector<24x128xf32>
    %35 = arith.maximumf %33, %34 : vector<24x128xf32>
    %36 = arith.mulf %30, %35 : vector<24x128xf32>
    %37 = arith.mulf %36, %36 : vector<24x128xf32>
    %c0_15 = arith.constant 0 : index
    %c0_16 = arith.constant 0 : index
    %38 = vector.load %arg6[%c0_15, %c0_16] : memref<128x32xf32, #tpu.memory_space<vmem>>, vector<128x32xf32>
    %cst_17 = arith.constant dense<0.000000e+00> : vector<24x32xf32>
    %39 = tpu.matmul %37, %38, %cst_17 {dimension_numbers = #tpu.dot_dimension_numbers<[1], [0], [0], [1], [0, 0, 1, 1], [], []>} : vector<24x128xf32>, vector<128x32xf32>, vector<24x32xf32> -> vector<24x32xf32>
    %c0_18 = arith.constant 0 : index
    %c0_19 = arith.constant 0 : index
    %40 = vector.load %arg7[%c0_18, %c0_19] : memref<1x32xf32, #tpu.memory_space<vmem>>, vector<1x32xf32>
    %41 = vector.broadcast %40 : vector<1x32xf32> to vector<24x32xf32>
    %42 = arith.addf %39, %41 : vector<24x32xf32>
    %c0_20 = arith.constant 0 : index
    %c0_21 = arith.constant 0 : index
    %43 = vector.load %arg8[%c0_20, %c0_21] : memref<24x32xf32, #tpu.memory_space<vmem>>, vector<24x32xf32>
    tpu.vector_store %arg8[%c0_20, %c0_21], %42 {strides = array<i32>} : memref<24x32xf32, #tpu.memory_space<vmem>>, vector<24x32xf32>,
    return
  }
  func.func @transform_0(%arg0: i32) -> (i32, i32) {
    %c0_i32 = arith.constant 0 : i32
    %c0_i32_0 = arith.constant 0 : i32
    return %arg0, %c0_i32 : i32, i32
  }
  func.func @transform_1(%arg0: i32) -> (i32, i32) {
    %c0_i32 = arith.constant 0 : i32
    %c0_i32_0 = arith.constant 0 : i32
    %c0_i32_1 = arith.constant 0 : i32
    return %c0_i32, %c0_i32_0 : i32, i32
  }
  func.func @transform_2(%arg0: i32) -> (i32, i32) {
    %c0_i32 = arith.constant 0 : i32
    %c0_i32_0 = arith.constant 0 : i32
    %c0_i32_1 = arith.constant 0 : i32
    return %c0_i32, %c0_i32_0 : i32, i32
  }
  func.func @transform_3(%arg0: i32) -> (i32, i32) {
    %c0_i32 = arith.constant 0 : i32
    %c0_i32_0 = arith.constant 0 : i32
    %c0_i32_1 = arith.constant 0 : i32
    return %c0_i32, %c0_i32_0 : i32, i32
  }
  func.func @transform_4(%arg0: i32) -> (i32, i32) {
    %c0_i32 = arith.constant 0 : i32
    %c0_i32_0 = arith.constant 0 : i32
    %c0_i32_1 = arith.constant 0 : i32
    return %c0_i32, %c0_i32_0 : i32, i32
  }
  func.func @transform_5(%arg0: i32) -> (i32, i32) {
    %c0_i32 = arith.constant 0 : i32
    %c0_i32_0 = arith.constant 0 : i32
    %c0_i32_1 = arith.constant 0 : i32
    return %c0_i32, %c0_i32_0 : i32, i32
  }
  func.func @transform_6(%arg0: i32) -> (i32, i32) {
    %c0_i32 = arith.constant 0 : i32
    %c0_i32_0 = arith.constant 0 : i32
    %c0_i32_1 = arith.constant 0 : i32
    return %c0_i32, %c0_i32_0 : i32, i32
  }
  func.func @transform_7(%arg0: i32) -> (i32, i32) {
    %c0_i32 = arith.constant 0 : i32
    %c0_i32_0 = arith.constant 0 : i32
    return %arg0, %c0_i32 : i32, i32
  }
}

</mosaic_0001>

<llo_original>
// kernel: tpu_custom_call.1
$region0: #{tpu_custom_call.1}
  #allocation0 [shape = 'u32[]', space=smem, size = 0x4, offset = 0x4, fixed_abs, tag = 'smem constant byte address 0x4 - core index']
  #allocation1 [shape = 'u32[144,128]{1,0:T(1,128)}', space=vmem, size = 0x12000, scoped, tag = 'internal scratch']
  %s0 = inlined_call_operand.vmem [shape: f32[48,16], index: 0, kind: input, shape index: {}]
  %s1 = inlined_call_operand.vmem [shape: f32[1,16], index: 1, kind: input, shape index: {}]
  %s2 = inlined_call_operand.vmem [shape: f32[1,16], index: 2, kind: input, shape index: {}]
  %s3 = inlined_call_operand.vmem [shape: f32[1,128], index: 3, kind: input, shape index: {}]
  %s4 = inlined_call_operand.vmem [shape: f32[1,128], index: 4, kind: input, shape index: {}]
  %s5 = inlined_call_operand.vmem [shape: f32[128,32], index: 5, kind: input, shape index: {}]
  %s6 = inlined_call_operand.vmem [shape: f32[1,32], index: 6, kind: input, shape index: {}]
  %s7 = inlined_call_operand.vmem [shape: f32[48,32], index: 7, kind: output, shape index: {}]
  %s8 = sld [smem:[#allocation0]]
  $region61: #{tpu_custom_call.1} parent=0
    _
  %s10 = ssub.s32 1, %s8
  %s11 = scalar_select 0, %s10, %s8
  loop: start=0, step=1, limit=4
  $region2: #{tpu_custom_call.1} parent=0 // loop_pre_header
    _
  $region3: #{tpu_custom_call.1} parent=0 // loop_header
    %s13 = sphi 0, %s17
    %p14 = scmp.ge.s32.totalorder %s13, 4
    %s23 = sphi 0, %s25
    %s26 = sphi 0, %s23
    %s27 = sphi 0, %s26
    %s43 = sphi 0, %s27
    %s47 = sphi 0, %s47
    %s49 = sphi 0, %s47
    %s50 = sphi 0, %s49
    %s64 = sphi 0, %s50
    %s68 = sphi 0, %s68
    %s70 = sphi 0, %s68
    %s71 = sphi 0, %s70
    %s85 = sphi 0, %s71
    %s89 = sphi 0, %s89
    %s91 = sphi 0, %s89
    %s92 = sphi 0, %s91
    %s106 = sphi 0, %s92
    %s110 = sphi 0, %s110
    %s112 = sphi 0, %s110
    %s113 = sphi 0, %s112
    %s127 = sphi 0, %s113
    %s131 = sphi 0, %s131
    %s133 = sphi 0, %s131
    %s134 = sphi 0, %s133
    %s148 = sphi 0, %s134
    %s152 = sphi 0, %s152
    %s154 = sphi 0, %s152
    %s155 = sphi 0, %s154
    %s169 = sphi 0, %s155
    %s175 = sphi 0, %s177
    %s178 = sphi 0, %s175
    %s179 = sphi 0, %s178
    %s195 = sphi 0, %s179
  $region4: #{tpu_custom_call.1} parent=0 // loop_header_branch
    %16 = sbr.rel (%p14) target = $region8
  $region5: #{tpu_custom_call.1} parent=0 // loop_body
    %s18 = ssub.s32 %s13, 1
    %s19 = ssub.s32 %s13, 2
    %s20 = sadd.s32 %s13, 1
    %s21 = ssub.s32 %s13, %s20
    %p22 = scmp.eq.s32.totalorder %s21, 0
    %s24 = sadd.s32 %s23, 1
    %s25 = scalar_select %p22, %s23, %s24
    %p28 = pneg %p22
    %p29 = scmp.eq.s32.totalorder %s13, 1
    %p30 = por %p28, %p29
    %p31 = scmp.ne.s32.totalorder %s23, %s26
    %p32 = scmp.eq.s32.totalorder %s13, 0
    %p33 = por %p31, %p32
    %p34 = scmp.ne.s32.totalorder %s23, %s26
    %p35 = scmp.eq.s32.totalorder %s18, 1
    %p36 = por %p34, %p35
    %p37 = scmp.ne.s32.totalorder %s26, %s27
    %p38 = scmp.eq.s32.totalorder %s18, 0
    %p39 = por %p37, %p38
    %p40 = scmp.ne.s32.totalorder %s26, %s27
    %p41 = scmp.eq.s32.totalorder %s19, 1
    %p42 = por %p40, %p41
    %p44 = scmp.ne.s32.totalorder %s27, %s43
    %p45 = scmp.eq.s32.totalorder %s19, 0
    %p46 = por %p44, %p45
    %s48 = sadd.s32 %s47, 1
    %p51 = scmp.eq.s32.totalorder %s13, 1
    %p52 = scmp.ne.s32.totalorder %s47, %s49
    %p53 = scmp.eq.s32.totalorder %s13, 0
    %p54 = por %p52, %p53
    %p55 = scmp.ne.s32.totalorder %s47, %s49
    %p56 = scmp.eq.s32.totalorder %s18, 1
    %p57 = por %p55, %p56
    %p58 = scmp.ne.s32.totalorder %s49, %s50
    %p59 = scmp.eq.s32.totalorder %s18, 0
    %p60 = por %p58, %p59
    %p61 = scmp.ne.s32.totalorder %s49, %s50
    %p62 = scmp.eq.s32.totalorder %s19, 1
    %p63 = por %p61, %p62
    %p65 = scmp.ne.s32.totalorder %s50, %s64
    %p66 = scmp.eq.s32.totalorder %s19, 0
    %p67 = por %p65, %p66
    %s69 = sadd.s32 %s68, 1
    %p72 = scmp.eq.s32.totalorder %s13, 1
    %p73 = scmp.ne.s32.totalorder %s68, %s70
    %p74 = scmp.eq.s32.totalorder %s13, 0
    %p75 = por %p73, %p74
    %p76 = scmp.ne.s32.totalorder %s68, %s70
    %p77 = scmp.eq.s32.totalorder %s18, 1
    %p78 = por %p76, %p77
    %p79 = scmp.ne.s32.totalorder %s70, %s71
    %p80 = scmp.eq.s32.totalorder %s18, 0
    %p81 = por %p79, %p80
    %p82 = scmp.ne.s32.totalorder %s70, %s71
    %p83 = scmp.eq.s32.totalorder %s19, 1
    %p84 = por %p82, %p83
    %p86 = scmp.ne.s32.totalorder %s71, %s85
    %p87 = scmp.eq.s32.totalorder %s19, 0
    %p88 = por %p86, %p87
    %s90 = sadd.s32 %s89, 1
    %p93 = scmp.eq.s32.totalorder %s13, 1
    %p94 = scmp.ne.s32.totalorder %s89, %s91
    %p95 = scmp.eq.s32.totalorder %s13, 0
    %p96 = por %p94, %p95
    %p97 = scmp.ne.s32.totalorder %s89, %s91
    %p98 = scmp.eq.s32.totalorder %s18, 1
    %p99 = por %p97, %p98
    %p100 = scmp.ne.s32.totalorder %s91, %s92
    %p101 = scmp.eq.s32.totalorder %s18, 0
    %p102 = por %p100, %p101
    %p103 = scmp.ne.s32.totalorder %s91, %s92
    %p104 = scmp.eq.s32.totalorder %s19, 1
    %p105 = por %p103, %p104
    %p107 = scmp.ne.s32.totalorder %s92, %s106
    %p108 = scmp.eq.s32.totalorder %s19, 0
    %p109 = por %p107, %p108
    %s111 = sadd.s32 %s110, 1
    %p114 = scmp.eq.s32.totalorder %s13, 1
    %p115 = scmp.ne.s32.totalorder %s110, %s112
    %p116 = scmp.eq.s32.totalorder %s13, 0
    %p117 = por %p115, %p116
    %p118 = scmp.ne.s32.totalorder %s110, %s112
    %p119 = scmp.eq.s32.totalorder %s18, 1
    %p120 = por %p118, %p119
    %p121 = scmp.ne.s32.totalorder %s112, %s113
    %p122 = scmp.eq.s32.totalorder %s18, 0
    %p123 = por %p121, %p122
    %p124 = scmp.ne.s32.totalorder %s112, %s113
    %p125 = scmp.eq.s32.totalorder %s19, 1
    %p126 = por %p124, %p125
    %p128 = scmp.ne.s32.totalorder %s113, %s127
    %p129 = scmp.eq.s32.totalorder %s19, 0
    %p130 = por %p128, %p129
    %s132 = sadd.s32 %s131, 1
    %p135 = scmp.eq.s32.totalorder %s13, 1
    %p136 = scmp.ne.s32.totalorder %s131, %s133
    %p137 = scmp.eq.s32.totalorder %s13, 0
    %p138 = por %p136, %p137
    %p139 = scmp.ne.s32.totalorder %s131, %s133
    %p140 = scmp.eq.s32.totalorder %s18, 1
    %p141 = por %p139, %p140
    %p142 = scmp.ne.s32.totalorder %s133, %s134
    %p143 = scmp.eq.s32.totalorder %s18, 0
    %p144 = por %p142, %p143
    %p145 = scmp.ne.s32.totalorder %s133, %s134
    %p146 = scmp.eq.s32.totalorder %s19, 1
    %p147 = por %p145, %p146
    %p149 = scmp.ne.s32.totalorder %s134, %s148
    %p150 = scmp.eq.s32.totalorder %s19, 0
    %p151 = por %p149, %p150
    %s153 = sadd.s32 %s152, 1
    %p156 = scmp.eq.s32.totalorder %s13, 1
    %p157 = scmp.ne.s32.totalorder %s152, %s154
    %p158 = scmp.eq.s32.totalorder %s13, 0
    %p159 = por %p157, %p158
    %p160 = scmp.ne.s32.totalorder %s152, %s154
    %p161 = scmp.eq.s32.totalorder %s18, 1
    %p162 = por %p160, %p161
    %p163 = scmp.ne.s32.totalorder %s154, %s155
    %p164 = scmp.eq.s32.totalorder %s18, 0
    %p165 = por %p163, %p164
    %p166 = scmp.ne.s32.totalorder %s154, %s155
    %p167 = scmp.eq.s32.totalorder %s19, 1
    %p168 = por %p166, %p167
    %p170 = scmp.ne.s32.totalorder %s155, %s169
    %p171 = scmp.eq.s32.totalorder %s19, 0
    %p172 = por %p170, %p171
    %s173 = ssub.s32 %s13, %s20
    %p174 = scmp.eq.s32.totalorder %s173, 0
    %s176 = sadd.s32 %s175, 1
    %s177 = scalar_select %p174, %s175, %s176
    %p180 = pneg %p174
    %p181 = scmp.eq.s32.totalorder %s13, 1
    %p182 = por %p180, %p181
    %p183 = scmp.ne.s32.totalorder %s175, %s178
    %p184 = scmp.eq.s32.totalorder %s13, 0
    %p185 = por %p183, %p184
    %p186 = scmp.ne.s32.totalorder %s175, %s178
    %p187 = scmp.eq.s32.totalorder %s18, 1
    %p188 = por %p186, %p187
    %p189 = scmp.ne.s32.totalorder %s178, %s179
    %p190 = scmp.eq.s32.totalorder %s18, 0
    %p191 = por %p189, %p190
    %p192 = scmp.ne.s32.totalorder %s178, %s179
    %p193 = scmp.eq.s32.totalorder %s19, 1
    %p194 = por %p192, %p193
    %p196 = scmp.ne.s32.totalorder %s179, %s195
    %p197 = scmp.eq.s32.totalorder %s19, 0
    %p198 = por %p196, %p197
    %p199 = scmp.le.s32.totalorder 1, %s13
    %p200 = scmp.lt.s32.totalorder %s13, 3
    %p201 = pnand %p199, %p200
    %p202 = pneg %p201
    // Predicated region
    $region9: #{tpu_custom_call.1} parent=5 // pred_check
      _
    $region10: #{tpu_custom_call.1} parent=5 // pred_check_branch
      %204 = sbr.rel (%p201) target = $region12
    $region11: #{tpu_custom_call.1} parent=5 // pred_region
      %s205 = ssub.s32 %s13, 1
      // Predicated region
      $region13: #{tpu_custom_call.1} parent=11 // pred_check
        %p206 = pneg %p60
      $region14: #{tpu_custom_call.1} parent=11 // pred_check_branch
        %208 = sbr.rel (%p206) target = $region16
      $region15: #{tpu_custom_call.1} parent=11 // pred_region
        _
      $region16: #{tpu_custom_call.1} parent=11 // pred_fallthru
        _
      // Predicated region
      $region17: #{tpu_custom_call.1} parent=11 // pred_check
        %p209 = pneg %p81
      $region18: #{tpu_custom_call.1} parent=11 // pred_check_branch
        %211 = sbr.rel (%p209) target = $region20
      $region19: #{tpu_custom_call.1} parent=11 // pred_region
        _
      $region20: #{tpu_custom_call.1} parent=11 // pred_fallthru
        _
      // Predicated region
      $region21: #{tpu_custom_call.1} parent=11 // pred_check
        %p212 = pneg %p102
      $region22: #{tpu_custom_call.1} parent=11 // pred_check_branch
        %214 = sbr.rel (%p212) target = $region24
      $region23: #{tpu_custom_call.1} parent=11 // pred_region
        _
      $region24: #{tpu_custom_call.1} parent=11 // pred_fallthru
        _
      // Predicated region
      $region25: #{tpu_custom_call.1} parent=11 // pred_check
        %p215 = pneg %p123
      $region26: #{tpu_custom_call.1} parent=11 // pred_check_branch
        %217 = sbr.rel (%p215) target = $region28
      $region27: #{tpu_custom_call.1} parent=11 // pred_region
        _
      $region28: #{tpu_custom_call.1} parent=11 // pred_fallthru
        _
      // Predicated region
      $region29: #{tpu_custom_call.1} parent=11 // pred_check
        %p218 = pneg %p144
      $region30: #{tpu_custom_call.1} parent=11 // pred_check_branch
        %220 = sbr.rel (%p218) target = $region32
      $region31: #{tpu_custom_call.1} parent=11 // pred_region
        _
      $region32: #{tpu_custom_call.1} parent=11 // pred_fallthru
        _
      // Predicated region
      $region33: #{tpu_custom_call.1} parent=11 // pred_check
        %p221 = pneg %p165
      $region34: #{tpu_custom_call.1} parent=11 // pred_check_branch
        %223 = sbr.rel (%p221) target = $region36
      $region35: #{tpu_custom_call.1} parent=11 // pred_region
        _
      $region36: #{tpu_custom_call.1} parent=11 // pred_fallthru
        _
    $region12: #{tpu_custom_call.1} parent=5 // pred_fallthru
      _
    %p224 = scmp.lt.s32.totalorder %s13, 2
    // Predicated region
    $region37: #{tpu_custom_call.1} parent=5 // pred_check
      %p225 = pneg %p224
    $region38: #{tpu_custom_call.1} parent=5 // pred_check_branch
      %227 = sbr.rel (%p225) target = $region40
    $region39: #{tpu_custom_call.1} parent=5 // pred_region
      // Predicated region
      $region41: #{tpu_custom_call.1} parent=39 // pred_check
        %p228 = pneg %p33
      $region42: #{tpu_custom_call.1} parent=39 // pred_check_branch
        %230 = sbr.rel (%p228) target = $region44
      $region43: #{tpu_custom_call.1} parent=39 // pred_region
        %s231 = smul.u32 3, %s13
        %p232 = scmp.lt.s32.totalorder %s231, 5
        %s233 = scalar_select %p232, %s231, 5
        %s234 = smul.addr %s233, 8
        %s235 = scalar_lea.vmem %s0, %s234
        %s236 = smul.u32 3, %s13
      $region44: #{tpu_custom_call.1} parent=39 // pred_fallthru
        _
    $region40: #{tpu_custom_call.1} parent=5 // pred_fallthru
      _
    %p237 = scmp.le.s32.totalorder 1, %s13
    %p238 = scmp.lt.s32.totalorder %s13, 3
    %p239 = pnand %p237, %p238
    %p240 = pneg %p239
    // Predicated region
    $region45: #{tpu_custom_call.1} parent=5 // pred_check
      _
    $region46: #{tpu_custom_call.1} parent=5 // pred_check_branch
      %242 = sbr.rel (%p239) target = $region48
    $region47: #{tpu_custom_call.1} parent=5 // pred_region
      %s243 = ssub.s32 %s13, 1
      %s244 = smul.u32 3, %s18
      %p245 = scmp.lt.s32.totalorder %s244, 5
      %s246 = scalar_select %p245, %s244, 5
      %s247 = smul.addr %s246, 8
      %s248 = scalar_lea.vmem %s0, %s247
      %p249 = pneg %p39
      %p250 = pneg %p36
      %p251 = pneg %p60
      %p252 = pneg %p57
      %p253 = pneg %p81
      %p254 = pneg %p78
      %p255 = pneg %p102
      %p256 = pneg %p99
      %p257 = pneg %p123
      %p258 = pneg %p120
      %p259 = pneg %p144
      %p260 = pneg %p141
      %p261 = pneg %p165
      %p262 = pneg %p162
      %p263 = pneg %p191
      %p264 = pneg %p188
      %s265 = smul.u32 3, %s18
      %p266 = scmp.lt.s32.totalorder %s265, 5
      %s267 = scalar_select %p266, %s265, 5
      %s268 = smul.addr %s267, 8
      %s269 = scalar_lea.vmem %s7, %s268
      %s270 = smul.u32 3, %s18
      %p271 = scmp.lt.s32.totalorder %s270, 5
      %s272 = scalar_select %p271, %s270, 5
      %s273 = smul.addr %s272, 8
      %s274 = scalar_lea.vmem %s0, %s273
      %s275 = smul.u32 3, %s18
      %s276 = smul.u32 3, %s18
      %p277 = scmp.lt.s32.totalorder %s276, 5
      %s278 = scalar_select %p277, %s276, 5
      %s279 = smul.addr %s278, 8
      %s280 = scalar_lea.vmem %s7, %s279
      %s281 = smul.u32 3, %s18
      %v282 = vld [vmem:[%s274] sm:$0xff]
      %v283 = vld [vmem:[%s274 + $0x8] sm:$0xff]
      %v284 = vld [vmem:[%s274 + $0x10] sm:$0xff]
      %vm285 = vcmask 130048
      %v286 = vsel %vm285, %v282, 0.0
      %287 = vadd.xlane.f32.xlu0 %v286
      %v288 = vpop.xlane.xlu0 %287
      %v289 = vsel %vm285, %v283, 0.0
      %290 = vadd.xlane.f32.xlu0 %v289
      %v291 = vpop.xlane.xlu0 %290
      %v292 = vsel %vm285, %v284, 0.0
      %293 = vadd.xlane.f32.xlu0 %v292
      %v294 = vpop.xlane.xlu0 %293
      %v295 = vmul.f32 %v288, 0.0625
      %v296 = vmul.f32 %v291, 0.0625
      %v297 = vmul.f32 %v294, 0.0625
      %v298 = vmul.f32 %v282, %v282
      %v299 = vmul.f32 %v283, %v283
      %v300 = vmul.f32 %v284, %v284
      %v301 = vsel %vm285, %v298, 0.0
      %302 = vadd.xlane.f32.xlu0 %v301
      %v303 = vpop.xlane.xlu0 %302
      %v304 = vsel %vm285, %v299, 0.0
      %305 = vadd.xlane.f32.xlu0 %v304
      %v306 = vpop.xlane.xlu0 %305
      %v307 = vsel %vm285, %v300, 0.0
      %308 = vadd.xlane.f32.xlu0 %v307
      %v309 = vpop.xlane.xlu0 %308
      %v310 = vmul.f32 %v303, 0.0625
      %v311 = vmul.f32 %v306, 0.0625
      %v312 = vmul.f32 %v309, 0.0625
      %v313 = vmul.f32 %v295, %v295
      %v314 = vmul.f32 %v296, %v296
      %v315 = vmul.f32 %v297, %v297
      %v316 = vsub.f32 %v310, %v313
      %v317 = vsub.f32 %v311, %v314
      %v318 = vsub.f32 %v312, %v315
      %v319 = vsub.f32 %v282, %v295
      %v320 = vsub.f32 %v283, %v296
      %v321 = vsub.f32 %v284, %v297
      %v322 = vadd.f32 %v316, 1e-05
      %v323 = vadd.f32 %v317, 1e-05
      %v324 = vadd.f32 %v318, 1e-05
      %v325 = vrsqrt.pop %v322
      %v326 = vrsqrt.pop %v323
      %v327 = vrsqrt.pop %v324
      %v328 = vmul.f32 %v319, %v325
      %v329 = vmul.f32 %v320, %v326
      %v330 = vmul.f32 %v321, %v327
      %v331 = vld [vmem:[%s1] sm:$0x1]
      %v333 = vlaneseq
      %v334 = vshrl.u32 %v333, 7
      %v335 = vsub.s32 0, %v334
      %v336 = vrot.slane %v331, %v335
      %v338 = vmul.f32 %v328, %v336
      %v339 = vmul.f32 %v329, %v336
      %v340 = vmul.f32 %v330, %v336
      %v341 = vld [vmem:[%s2] sm:$0x1]
      %v343 = vlaneseq
      %v344 = vshrl.u32 %v343, 7
      %v345 = vsub.s32 0, %v344
      %v346 = vrot.slane %v341, %v345
      %v348 = vadd.f32 %v338, %v346
      %v349 = vadd.f32 %v339, %v346
      %v350 = vadd.f32 %v340, %v346
      %354 = vrot.lane.b32.xlu0 %v348, 16
      %v355 = vpop.permute.xlu0 %354
      %356 = vrot.lane.b32.xlu0 %v349, 16
      %v357 = vpop.permute.xlu0 %356
      %358 = vrot.lane.b32.xlu0 %v350, 16
      %v359 = vpop.permute.xlu0 %358
      %363 = vrot.lane.b32.xlu0 %v348, 32
      %v364 = vpop.permute.xlu0 %363
      %365 = vrot.lane.b32.xlu0 %v349, 32
      %v366 = vpop.permute.xlu0 %365
      %367 = vrot.lane.b32.xlu0 %v350, 32
      %v368 = vpop.permute.xlu0 %367
      %372 = vrot.lane.b32.xlu0 %v348, 48
      %v373 = vpop.permute.xlu0 %372
      %374 = vrot.lane.b32.xlu0 %v349, 48
      %v375 = vpop.permute.xlu0 %374
      %376 = vrot.lane.b32.xlu0 %v350, 48
      %v377 = vpop.permute.xlu0 %376
      %381 = vrot.lane.b32.xlu0 %v348, 64
      %v382 = vpop.permute.xlu0 %381
      %383 = vrot.lane.b32.xlu0 %v349, 64
      %v384 = vpop.permute.xlu0 %383
      %385 = vrot.lane.b32.xlu0 %v350, 64
      %v386 = vpop.permute.xlu0 %385
      %390 = vrot.lane.b32.xlu0 %v348, 80
      %v391 = vpop.permute.xlu0 %390
      %392 = vrot.lane.b32.xlu0 %v349, 80
      %v393 = vpop.permute.xlu0 %392
      %394 = vrot.lane.b32.xlu0 %v350, 80
      %v395 = vpop.permute.xlu0 %394
      %399 = vrot.lane.b32.xlu0 %v348, 96
      %v400 = vpop.permute.xlu0 %399
      %401 = vrot.lane.b32.xlu0 %v349, 96
      %v402 = vpop.permute.xlu0 %401
      %403 = vrot.lane.b32.xlu0 %v350, 96
      %v404 = vpop.permute.xlu0 %403
      %408 = vrot.lane.b32.xlu0 %v348, 112
      %v409 = vpop.permute.xlu0 %408
      %410 = vrot.lane.b32.xlu0 %v349, 112
      %v411 = vpop.permute.xlu0 %410
      %412 = vrot.lane.b32.xlu0 %v350, 112
      %v413 = vpop.permute.xlu0 %412
      %v417 = vsel %vm285, %v348, %v355
      %v418 = vsel %vm285, %v349, %v357
      %v419 = vsel %vm285, %v350, %v359
      %vm420 = vcmask 261120
      %v421 = vsel %vm420, %v417, %v364
      %v422 = vsel %vm420, %v418, %v366
      %v423 = vsel %vm420, %v419, %v368
      %vm424 = vcmask 392192
      %v425 = vsel %vm424, %v421, %v373
      %v426 = vsel %vm424, %v422, %v375
      %v427 = vsel %vm424, %v423, %v377
      %vm428 = vcmask 523264
      %v429 = vsel %vm428, %v425, %v382
      %v430 = vsel %vm428, %v426, %v384
      %v431 = vsel %vm428, %v427, %v386
      %vm432 = vcmask 654336
      %v433 = vsel %vm432, %v429, %v391
      %v434 = vsel %vm432, %v430, %v393
      %v435 = vsel %vm432, %v431, %v395
      %vm436 = vcmask 785408
      %v437 = vsel %vm436, %v433, %v400
      %v438 = vsel %vm436, %v434, %v402
      %v439 = vsel %vm436, %v435, %v404
      %vm440 = vcmask 916480
      %v441 = vsel %vm440, %v437, %v409
      %v442 = vsel %vm440, %v438, %v411
      %v443 = vsel %vm440, %v439, %v413
      %v444 = vld [vmem:[%s3] sm:$0x1]
      %v446 = vlaneseq
      %v447 = vshrl.u32 %v446, 7
      %v448 = vsub.s32 0, %v447
      %v449 = vrot.slane %v444, %v448
      %v451 = vsub.f32 %v441, %v449
      %v452 = vsub.f32 %v442, %v449
      %v453 = vsub.f32 %v443, %v449
      %v454 = vmax.f32 %v451, 0.0
      %v455 = vmax.f32 %v452, 0.0
      %v456 = vmax.f32 %v453, 0.0
      %v457 = vld [vmem:[%s4] sm:$0x1]
      %v459 = vlaneseq
      %v460 = vshrl.u32 %v459, 7
      %v461 = vsub.s32 0, %v460
      %v462 = vrot.slane %v457, %v461
      %v464 = vsub.f32 %v462, %v441
      %v465 = vsub.f32 %v462, %v442
      %v466 = vsub.f32 %v462, %v443
      %v467 = vmax.f32 %v464, 0.0
      %v468 = vmax.f32 %v465, 0.0
      %v469 = vmax.f32 %v466, 0.0
      %v470 = vmul.f32 %v454, %v467
      %v471 = vmul.f32 %v455, %v468
      %v472 = vmul.f32 %v456, %v469
      %v473 = vmul.f32 %v470, %v470
      %v474 = vmul.f32 %v471, %v471
      %v475 = vmul.f32 %v472, %v472
      %v476 = vld [vmem:[%s5] sm:$0xff]
      %v477 = vld [vmem:[%s5 + $0x8] sm:$0xff]
      %v478 = vld [vmem:[%s5 + $0x10] sm:$0xff]
      %v479 = vld [vmem:[%s5 + $0x18] sm:$0xff]
      %v480 = vld [vmem:[%s5 + $0x20] sm:$0xff]
      %v481 = vld [vmem:[%s5 + $0x28] sm:$0xff]
      %v482 = vld [vmem:[%s5 + $0x30] sm:$0xff]
      %v483 = vld [vmem:[%s5 + $0x38] sm:$0xff]
      %v484 = vld [vmem:[%s5 + $0x40] sm:$0xff]
      %v485 = vld [vmem:[%s5 + $0x48] sm:$0xff]
      %v486 = vld [vmem:[%s5 + $0x50] sm:$0xff]
      %v487 = vld [vmem:[%s5 + $0x58] sm:$0xff]
      %v488 = vld [vmem:[%s5 + $0x60] sm:$0xff]
      %v489 = vld [vmem:[%s5 + $0x68] sm:$0xff]
      %v490 = vld [vmem:[%s5 + $0x70] sm:$0xff]
      %v491 = vld [vmem:[%s5 + $0x78] sm:$0xff]
      %v492 = vld [vmem:[%s6] sm:$0x1]
      %v494 = vlaneseq
      %v495 = vshrl.u32 %v494, 7
      %v496 = vsub.s32 0, %v495
      %v497 = vrot.slane %v492, %v496
      %499 = vmatprep.subr.mxu0 0.0
      %500 = vmatpush1.msra.mxu0 %v476
      %501 = vmatprep.subr.mxu0 0.0
      %502 = vmatpush1.msra.mxu0 %v477
      %503 = vmatprep.subr.mxu0 0.0
      %504 = vmatpush1.msra.mxu0 %v478
      %505 = vmatprep.subr.mxu0 0.0
      %506 = vmatpush1.msra.mxu0 %v479
      %507 = vmatprep.subr.mxu0 0.0
      %508 = vmatpush1.msra.mxu0 %v480
      %509 = vmatprep.subr.mxu0 0.0
      %510 = vmatpush1.msra.mxu0 %v481
      %511 = vmatprep.subr.mxu0 0.0
      %512 = vmatpush1.msra.mxu0 %v482
      %513 = vmatprep.subr.mxu0 0.0
      %514 = vmatpush1.msra.mxu0 %v483
      %515 = vmatprep.subr.mxu0 0.0
      %516 = vmatpush1.msra.mxu0 %v484
      %517 = vmatprep.subr.mxu0 0.0
      %518 = vmatpush1.msra.mxu0 %v485
      %519 = vmatprep.subr.mxu0 0.0
      %520 = vmatpush1.msra.mxu0 %v486
      %521 = vmatprep.subr.mxu0 0.0
      %522 = vmatpush1.msra.mxu0 %v487
      %523 = vmatprep.subr.mxu0 0.0
      %524 = vmatpush1.msra.mxu0 %v488
      %525 = vmatprep.subr.mxu0 0.0
      %526 = vmatpush1.msra.mxu0 %v489
      %527 = vmatprep.subr.mxu0 0.0
      %528 = vmatpush1.msra.mxu0 %v490
      %529 = vmatprep.subr.mxu0 0.0
      %530 = vmatpush1.msra.mxu0 %v491
      %531 = vmatprep.subr.mxu0 0.0
      %532 = vmatpush1.msra.mxu0 0.0
      %533 = vmatprep.subr.mxu0 0.0
      %534 = vmatpush1.msra.mxu0 0.0
      %535 = vmatprep.subr.mxu0 0.0
      %536 = vmatpush1.msra.mxu0 0.0
      %537 = vmatprep.subr.mxu0 0.0
      %538 = vmatpush1.msra.mxu0 0.0
      %539 = vmatprep.subr.mxu0 0.0
      %540 = vmatpush1.msra.mxu0 0.0
      %541 = vmatprep.subr.mxu0 0.0
      %542 = vmatpush1.msra.mxu0 0.0
      %543 = vmatprep.subr.mxu0 0.0
      %544 = vmatpush1.msra.mxu0 0.0
      %545 = vmatprep.subr.mxu0 0.0
      %546 = vmatpush1.msra.mxu0 0.0
      %547 = vmatprep.subr.mxu0 0.0
      %548 = vmatpush1.msra.mxu0 0.0
      %549 = vmatprep.subr.mxu0 0.0
      %550 = vmatpush1.msra.mxu0 0.0
      %551 = vmatprep.subr.mxu0 0.0
      %552 = vmatpush1.msra.mxu0 0.0
      %553 = vmatprep.subr.mxu0 0.0
      %554 = vmatpush1.msra.mxu0 0.0
      %555 = vmatprep.subr.mxu0 0.0
      %556 = vmatpush1.msra.mxu0 0.0
      %557 = vmatprep.subr.mxu0 0.0
      %558 = vmatpush1.msra.mxu0 0.0
      %559 = vmatprep.subr.mxu0 0.0
      %560 = vmatpush1.msra.mxu0 0.0
      %561 = vmatprep.subr.mxu0 0.0
      %562 = vmatpush1.msra.mxu0 0.0
      %563 = vmatprep.mubr.f32.mxu0 0.0
      %564 = vmatmul.mubr.f32.gmra.mrb[0].mxu0 %v473
      %v565 = vpop.f32.mrb[0].mxu0
      %v566 = vadd.f32 %v497, %v565
      %v567 = vpop.f32.mrb[0].mxu0
      %568 = vmatprep.mubr.f32.mxu0 0.0
      %569 = vmatmul.mubr.f32.gmra.mrb[0].mxu0 %v474
      %v570 = vpop.f32.mrb[0].mxu0
      %v571 = vadd.f32 %v497, %v570
      %v572 = vpop.f32.mrb[0].mxu0
      %573 = vmatprep.mubr.f32.mxu0 0.0
      %574 = vmatmul.mubr.f32.gmra.mrb[0].mxu0 %v475
      %v575 = vpop.f32.mrb[0].mxu0
      %v576 = vadd.f32 %v497, %v575
      %v577 = vpop.f32.mrb[0].mxu0
      %578 = vdwg.mxu0
      %579 = vst.msk [vmem:[%s280] sm:$0xff] %vm420, %v566
      %580 = vst.msk [vmem:[%s280 + $0x8] sm:$0xff] %vm420, %v571
      %581 = vst.msk [vmem:[%s280 + $0x10] sm:$0xff] %vm420, %v576
      %s582 = smul.u32 3, %s18
      %p583 = scmp.lt.s32.totalorder %s582, 5
      %s584 = scalar_select %p583, %s582, 5
      %s585 = smul.addr %s584, 8
      %s586 = scalar_lea.vmem %s7, %s585
      // Predicated region
      $region49: #{tpu_custom_call.1} parent=47 // pred_check
        %p587 = pneg %p188
      $region50: #{tpu_custom_call.1} parent=47 // pred_check_branch
        %589 = sbr.rel (%p587) target = $region52
      $region51: #{tpu_custom_call.1} parent=47 // pred_region
        %s590 = smul.u32 3, %s18
      $region52: #{tpu_custom_call.1} parent=47 // pred_fallthru
        _
    $region48: #{tpu_custom_call.1} parent=5 // pred_fallthru
      _
    %p591 = scmp.le.s32.totalorder 2, %s13
    // Predicated region
    $region53: #{tpu_custom_call.1} parent=5 // pred_check
      %p592 = pneg %p591
    $region54: #{tpu_custom_call.1} parent=5 // pred_check_branch
      %594 = sbr.rel (%p592) target = $region56
    $region55: #{tpu_custom_call.1} parent=5 // pred_region
      %s595 = ssub.s32 %s13, 2
      // Predicated region
      $region57: #{tpu_custom_call.1} parent=55 // pred_check
        %p596 = pneg %p194
      $region58: #{tpu_custom_call.1} parent=55 // pred_check_branch
        %598 = sbr.rel (%p596) target = $region60
      $region59: #{tpu_custom_call.1} parent=55 // pred_region
        %s599 = smul.u32 3, %s19
        %p600 = scmp.lt.s32.totalorder %s599, 5
        %s601 = scalar_select %p600, %s599, 5
        %s602 = smul.addr %s601, 8
        %s603 = scalar_lea.vmem %s7, %s602
      $region60: #{tpu_custom_call.1} parent=55 // pred_fallthru
        _
    $region56: #{tpu_custom_call.1} parent=5 // pred_fallthru
      _
  $region6: #{tpu_custom_call.1} parent=0 // loop_footer
    %s17 = sadd.s32 1, %s13
  $region7: #{tpu_custom_call.1} parent=0 // loop_footer_branch
    %12 = sbr.rel target = $region3
  $region8: #{tpu_custom_call.1} parent=0 // loop_exit
    _

</llo_original>
